<compile_context>
chip_gen: v7x
topology: tpu7x:2x2x1
jax: 0.10.0
libtpu: 0.0.40
codegen_flags: <defaults>
</compile_context>

<pallas_src>
import jax
import jax.numpy as jnp
from jax.experimental import pallas as pl
from jax.experimental.pallas import tpu as pltpu

H1, H2 = 400, 300          # logical hidden sizes (PyTorch spec)
H1P, H2P = 512, 384        # lane-padded hidden sizes (zero padding, exact)


def _round_up(n, m):
    return (n + m - 1) // m * m


# ----------------------------------------------------------------------------
# Kernel: one batch tile per grid step; weights VMEM-resident, b3 in SMEM.
# ----------------------------------------------------------------------------
def critic_kernel(x_ref, u_ref, w1x_ref, w1u_ref, b1_ref, w2_ref, b2_ref,
                  w3_ref, b3_ref, out_ref):
    # Layer 1: fused concat -> two bf16 MXU dots into one f32 accumulator.
    h1 = (jnp.dot(x_ref[...], w1x_ref[...], preferred_element_type=jnp.float32)
          + jnp.dot(u_ref[...], w1u_ref[...], preferred_element_type=jnp.float32))
    # ReLU + bf16 cast fused into the epilogue: h1 materializes as bf16.
    h1 = jnp.maximum(h1 + b1_ref[...], 0.0).astype(jnp.bfloat16)    # (tm, 512)

    # Layer 2.
    h2 = jnp.dot(h1, w2_ref[...], preferred_element_type=jnp.float32)
    h2 = jnp.maximum(h2 + b2_ref[...], 0.0)                         # (tm, 384) f32

    # Layer 3 (out_features == 1): VPU multiply + cross-lane reduce, then a
    # (tm,) -> lanes relayout so the store is a lane-dense (1, tm) block
    # instead of tm/8 masked single-lane stores.
    w3 = w3_ref[...].astype(jnp.float32)                            # (1, 384)
    val = jnp.sum(h2 * w3, axis=-1)                                 # (tm,)
    out_ref[...] = val[None, :] + b3_ref[0, 0]                      # (1, tm)


# ----------------------------------------------------------------------------
# Wrapper: batch tiling (no input pad), lane-dense output, resident weights.
# ----------------------------------------------------------------------------
def critic_forward(x, u, kparams, *, tm=None):
    """x: (B, S), u: (B, A) -> (B, 1) f32."""
    B, S = x.shape
    A = u.shape[1]

    # bf16 activations: halves activation HBM bytes; fuses into producer under jit.
    x = x.astype(jnp.bfloat16)
    u = u.astype(jnp.bfloat16)

    if tm is None:
        if B <= 512:
            tm = B                                     # single tile == full array
        else:
            # >= 2 grid steps (v7x megacore), tile capped at 2048 (VMEM-safe
            # on every generation with the 32 MiB scoped limit below).
            tm = min(2048, _round_up(pl.cdiv(B, 2), 128))
    n_tiles = pl.cdiv(B, tm)

    flops = 2 * B * ((S + A) * H1 + H1 * H2 + H2 * 1)
    bytes_accessed = (
        x.size * x.dtype.itemsize + u.size * u.dtype.itemsize
        + sum(int(v.size) * v.dtype.itemsize for v in kparams.values())
        + n_tiles * tm * 4)

    const = lambda i: (0, 0)
    out = pl.pallas_call(
        critic_kernel,
        out_shape=jax.ShapeDtypeStruct((n_tiles, 1, tm), jnp.float32),
        grid=(n_tiles,),
        in_specs=[
            pl.BlockSpec((tm, S), lambda i: (i, 0)),          # x tile (bf16)
            pl.BlockSpec((tm, A), lambda i: (i, 0)),          # u tile (bf16)
            pl.BlockSpec(kparams["w1x"].shape, const),        # weights: resident
            pl.BlockSpec(kparams["w1u"].shape, const),
            pl.BlockSpec(kparams["b1"].shape, const),
            pl.BlockSpec(kparams["w2"].shape, const),
            pl.BlockSpec(kparams["b2"].shape, const),
            pl.BlockSpec(kparams["w3"].shape, const),
            pl.BlockSpec(memory_space=pltpu.MemorySpace.SMEM),  # b3 scalar
        ],
        # Lane-dense output block: batch mapped to lanes, tile index on axis 0.
        out_specs=pl.BlockSpec((None, 1, tm), lambda i: (i, 0, 0)),
        compiler_params=pltpu.CompilerParams(
            dimension_semantics=("parallel",),                # megacore on v7x
            vmem_limit_bytes=32 * 1024 * 1024),
        cost_estimate=pl.CostEstimate(flops=flops, transcendentals=0,
                                      bytes_accessed=bytes_accessed),
    )(x, u, kparams["w1x"], kparams["w1u"], kparams["b1"],
      kparams["w2"], kparams["b2"], kparams["w3"], kparams["b3"])

    # (n_tiles, 1, tm) -> (n_tiles*tm, 1); rows >= B (partial tail tile) discarded.
    return out.reshape(n_tiles * tm, 1)[:B]


# ----------------------------------------------------------------------------
# Parameter init mirroring the PyTorch module's default path:
# xavier_uniform_ on weights; Linear-default bias U(-1/sqrt(fan_in), +).
# Master params are f32, (in, out) layout (transpose of torch (out, in)).
# TODO(synk): conf-driven alternative initializers (uniform_/constant_) from
# the PyTorch module are not replicated; only the default xavier path is.
# ----------------------------------------------------------------------------
def xavier_uniform(key, fan_in, fan_out):
    bound = jnp.sqrt(6.0 / (fan_in + fan_out))
    return jax.random.uniform(key, (fan_in, fan_out), jnp.float32,
                              minval=-bound, maxval=bound)


def init_critic_params(key, state_size, action_size):
    in_dim = state_size + action_size
    dims = [(in_dim, H1), (H1, H2), (H2, 1)]
    params = {}
    keys = jax.random.split(key, 6)
    for i, (fi, fo) in enumerate(dims, start=1):
        params[f"w{i}"] = xavier_uniform(keys[2 * (i - 1)], fi, fo)
        bb = 1.0 / jnp.sqrt(jnp.float32(fi))
        params[f"b{i}"] = jax.random.uniform(keys[2 * (i - 1) + 1], (1, fo),
                                             jnp.float32, minval=-bb, maxval=bb)
    return params


def prepare_kernel_params(params, state_size, action_size):
    """Zero-pad hidden dims to lane multiples and cast weights to bf16."""
    S, A = state_size, action_size
    f32, bf16 = jnp.float32, jnp.bfloat16

    w1 = jnp.zeros((S + A, H1P), f32).at[:, :H1].set(params["w1"])
    w2 = jnp.zeros((H1P, H2P), f32).at[:H1, :H2].set(params["w2"])
    w3 = jnp.zeros((1, H2P), f32).at[:, :H2].set(params["w3"].T)

    return {
        "w1x": w1[:S].astype(bf16),                      # (S, 512)
        "w1u": w1[S:].astype(bf16),                      # (A, 512)
        "b1": jnp.zeros((1, H1P), f32).at[:, :H1].set(params["b1"]),
        "w2": w2.astype(bf16),                           # (512, 384)
        "b2": jnp.zeros((1, H2P), f32).at[:, :H2].set(params["b2"]),
        "w3": w3.astype(bf16),                           # (1, 384)
        "b3": params["b3"],                              # (1, 1) f32 -> SMEM
    }


def critic_reference(x, u, params):
    xu = jnp.concatenate([x, u], axis=1)
    h1 = jnp.maximum(xu @ params["w1"] + params["b1"], 0.0)
    h2 = jnp.maximum(h1 @ params["w2"] + params["b2"], 0.0)
    return h2 @ params["w3"] + params["b3"]


if __name__ == "__main__":
    state_size, action_size, batch = 12, 4, 8

    key = jax.random.PRNGKey(0)
    kx, ku, kp, kx2, ku2, kx3, ku3 = jax.random.split(key, 7)
    params = init_critic_params(kp, state_size, action_size)
    kparams = prepare_kernel_params(params, state_size, action_size)

    # Small batch: single full-array tile (block == array dims).
    x = jax.random.normal(kx, (batch, state_size), jnp.float32)
    u = jax.random.normal(ku, (batch, action_size), jnp.float32)
    out = jax.block_until_ready(critic_forward(x, u, kparams))
    ref = critic_reference(x, u, params)
    assert out.shape == (batch, 1)
    assert jnp.allclose(out, ref, atol=2e-2, rtol=2e-2)   # bf16-compute tolerance

    # Larger batch with explicit tile: 2 grid steps, trailing partial block
    # (no wrapper-side padding; OOB rows discarded by [:B]).
    b2 = 200
    x2 = jax.random.normal(kx2, (b2, state_size), jnp.float32)
    u2 = jax.random.normal(ku2, (b2, action_size), jnp.float32)
    out2 = jax.block_until_ready(critic_forward(x2, u2, kparams, tm=128))
    ref2 = critic_reference(x2, u2, params)
    assert out2.shape == (b2, 1)
    assert jnp.allclose(out2, ref2, atol=2e-2, rtol=2e-2)

    # Default large-batch tiling path: tm=512, 2 grid steps, partial tail tile.
    b3 = 600
    x3 = jax.random.normal(kx3, (b3, state_size), jnp.float32)
    u3 = jax.random.normal(ku3, (b3, action_size), jnp.float32)
    out3 = jax.block_until_ready(critic_forward(x3, u3, kparams))
    ref3 = critic_reference(x3, u3, params)
    assert out3.shape == (b3, 1)
    assert jnp.allclose(out3, ref3, atol=2e-2, rtol=2e-2)

    print("KERNEL_OK")
</pallas_src>

<mosaic_0001>
module attributes {stable_mosaic.version = 11 : i64} {
  func.func @critic_kernel(%arg0: i32, %arg1: memref<8x12xbf16, #tpu.memory_space<vmem>>, %arg2: memref<8x4xbf16, #tpu.memory_space<vmem>>, %arg3: memref<12x512xbf16, #tpu.memory_space<vmem>>, %arg4: memref<4x512xbf16, #tpu.memory_space<vmem>>, %arg5: memref<1x512xf32, #tpu.memory_space<vmem>>, %arg6: memref<512x384xbf16, #tpu.memory_space<vmem>>, %arg7: memref<1x384xf32, #tpu.memory_space<vmem>>, %arg8: memref<1x384xbf16, #tpu.memory_space<vmem>>, %arg9: memref<1x1xf32, #tpu.memory_space<smem>>, %arg10: memref<1x1x8xf32, #tpu.memory_space<vmem>>) attributes {dimension_semantics = [#tpu.dimension_semantics<parallel>], iteration_bounds = array<i64: 1>, scalar_prefetch = 0 : i64, scratch_operands = 0 : i64, tpu.core_type = #tpu.core_type<tc>, window_params = [{transform_indices = @transform_0, window_bounds = array<i64: 8, 12>}, {transform_indices = @transform_1, window_bounds = array<i64: 8, 4>}, {pipeline_mode = #tpu.pipeline_mode<synchronous>, transform_indices = @transform_2, window_bounds = array<i64: 12, 512>}, {pipeline_mode = #tpu.pipeline_mode<synchronous>, transform_indices = @transform_3, window_bounds = array<i64: 4, 512>}, {pipeline_mode = #tpu.pipeline_mode<synchronous>, transform_indices = @transform_4, window_bounds = array<i64: 1, 512>}, {pipeline_mode = #tpu.pipeline_mode<synchronous>, transform_indices = @transform_5, window_bounds = array<i64: 512, 384>}, {pipeline_mode = #tpu.pipeline_mode<synchronous>, transform_indices = @transform_6, window_bounds = array<i64: 1, 384>}, {pipeline_mode = #tpu.pipeline_mode<synchronous>, transform_indices = @transform_7, window_bounds = array<i64: 1, 384>}, {transform_indices = @transform_8, window_bounds = array<i64: 1, 1>}, {transform_indices = @transform_9, window_bounds = array<i64: 1, 1, 8>}]} {
    %c0 = arith.constant 0 : index
    %c0_0 = arith.constant 0 : index
    %0 = vector.load %arg1[%c0, %c0_0] : memref<8x12xbf16, #tpu.memory_space<vmem>>, vector<8x12xbf16>
    %c0_1 = arith.constant 0 : index
    %c0_2 = arith.constant 0 : index
    %1 = vector.load %arg3[%c0_1, %c0_2] : memref<12x512xbf16, #tpu.memory_space<vmem>>, vector<12x512xbf16>
    %cst = arith.constant dense<0.000000e+00> : vector<8x512xf32>
    %2 = tpu.matmul %0, %1, %cst {dimension_numbers = #tpu.dot_dimension_numbers<[1], [0], [0], [1], [0, 0, 1, 1], [], []>} : vector<8x12xbf16>, vector<12x512xbf16>, vector<8x512xf32> -> vector<8x512xf32>
    %c0_3 = arith.constant 0 : index
    %c0_4 = arith.constant 0 : index
    %3 = vector.load %arg2[%c0_3, %c0_4] : memref<8x4xbf16, #tpu.memory_space<vmem>>, vector<8x4xbf16>
    %c0_5 = arith.constant 0 : index
    %c0_6 = arith.constant 0 : index
    %4 = vector.load %arg4[%c0_5, %c0_6] : memref<4x512xbf16, #tpu.memory_space<vmem>>, vector<4x512xbf16>
    %cst_7 = arith.constant dense<0.000000e+00> : vector<8x512xf32>
    %5 = tpu.matmul %3, %4, %cst_7 {dimension_numbers = #tpu.dot_dimension_numbers<[1], [0], [0], [1], [0, 0, 1, 1], [], []>} : vector<8x4xbf16>, vector<4x512xbf16>, vector<8x512xf32> -> vector<8x512xf32>
    %6 = arith.addf %2, %5 : vector<8x512xf32>
    %c0_8 = arith.constant 0 : index
    %c0_9 = arith.constant 0 : index
    %7 = vector.load %arg5[%c0_8, %c0_9] : memref<1x512xf32, #tpu.memory_space<vmem>>, vector<1x512xf32>
    %8 = vector.broadcast %7 : vector<1x512xf32> to vector<8x512xf32>
    %9 = arith.addf %6, %8 : vector<8x512xf32>
    %cst_10 = arith.constant 0.000000e+00 : f32
    %10 = vector.broadcast %cst_10 : f32 to vector<8x512xf32>
    %11 = arith.maximumf %9, %10 : vector<8x512xf32>
    %12 = arith.truncf %11 : vector<8x512xf32> to vector<8x512xbf16>
    %c0_11 = arith.constant 0 : index
    %c0_12 = arith.constant 0 : index
    %13 = vector.load %arg6[%c0_11, %c0_12] : memref<512x384xbf16, #tpu.memory_space<vmem>>, vector<512x384xbf16>
    %cst_13 = arith.constant dense<0.000000e+00> : vector<8x384xf32>
    %14 = tpu.matmul %12, %13, %cst_13 {dimension_numbers = #tpu.dot_dimension_numbers<[1], [0], [0], [1], [0, 0, 1, 1], [], []>} : vector<8x512xbf16>, vector<512x384xbf16>, vector<8x384xf32> -> vector<8x384xf32>
    %c0_14 = arith.constant 0 : index
    %c0_15 = arith.constant 0 : index
    %15 = vector.load %arg7[%c0_14, %c0_15] : memref<1x384xf32, #tpu.memory_space<vmem>>, vector<1x384xf32>
    %16 = vector.broadcast %15 : vector<1x384xf32> to vector<8x384xf32>
    %17 = arith.addf %14, %16 : vector<8x384xf32>
    %cst_16 = arith.constant 0.000000e+00 : f32
    %18 = vector.broadcast %cst_16 : f32 to vector<8x384xf32>
    %19 = arith.maximumf %17, %18 : vector<8x384xf32>
    %c0_17 = arith.constant 0 : index
    %c0_18 = arith.constant 0 : index
    %20 = vector.load %arg8[%c0_17, %c0_18] : memref<1x384xbf16, #tpu.memory_space<vmem>>, vector<1x384xbf16>
    %21 = arith.extf %20 : vector<1x384xbf16> to vector<1x384xf32>
    %22 = vector.broadcast %21 : vector<1x384xf32> to vector<8x384xf32>
    %23 = arith.mulf %19, %22 : vector<8x384xf32>
    %cst_19 = arith.constant dense<0.000000e+00> : vector<8xf32>
    %24 = vector.multi_reduction <add>, %23, %cst_19 [1] : vector<8x384xf32> to vector<8xf32>
    %25 = vector.shape_cast %24 : vector<8xf32> to vector<1x8xf32>
    %c0_20 = arith.constant 0 : index
    %c0_21 = arith.constant 0 : index
    %26 = memref.load %arg9[%c0_20, %c0_21] : memref<1x1xf32, #tpu.memory_space<smem>>
    %27 = vector.broadcast %26 : f32 to vector<1x8xf32>
    %28 = arith.addf %25, %27 : vector<1x8xf32>
    %c0_22 = arith.constant 0 : index
    %c0_23 = arith.constant 0 : index
    %c0_24 = arith.constant 0 : index
    %29 = vector.load %arg10[%c0_22, %c0_23, %c0_24] : memref<1x1x8xf32, #tpu.memory_space<vmem>>, vector<1x1x8xf32>
    %30 = vector.shape_cast %29 : vector<1x1x8xf32> to vector<1x8xf32>
    %31 = vector.shape_cast %28 : vector<1x8xf32> to vector<1x1x8xf32>
    tpu.vector_store %arg10[%c0_22, %c0_23, %c0_24], %31 {strides = array<i32>} : memref<1x1x8xf32, #tpu.memory_space<vmem>>, vector<1x1x8xf32>,
    return
  }
  func.func @transform_0(%arg0: i32) -> (i32, i32) {
    %c0_i32 = arith.constant 0 : i32
    %c0_i32_0 = arith.constant 0 : i32
    return %arg0, %c0_i32 : i32, i32
  }
  func.func @transform_1(%arg0: i32) -> (i32, i32) {
    %c0_i32 = arith.constant 0 : i32
    %c0_i32_0 = arith.constant 0 : i32
    return %arg0, %c0_i32 : i32, i32
  }
  func.func @transform_2(%arg0: i32) -> (i32, i32) {
    %c0_i32 = arith.constant 0 : i32
    %c0_i32_0 = arith.constant 0 : i32
    %c0_i32_1 = arith.constant 0 : i32
    return %c0_i32, %c0_i32_0 : i32, i32
  }
  func.func @transform_3(%arg0: i32) -> (i32, i32) {
    %c0_i32 = arith.constant 0 : i32
    %c0_i32_0 = arith.constant 0 : i32
    %c0_i32_1 = arith.constant 0 : i32
    return %c0_i32, %c0_i32_0 : i32, i32
  }
  func.func @transform_4(%arg0: i32) -> (i32, i32) {
    %c0_i32 = arith.constant 0 : i32
    %c0_i32_0 = arith.constant 0 : i32
    %c0_i32_1 = arith.constant 0 : i32
    return %c0_i32, %c0_i32_0 : i32, i32
  }
  func.func @transform_5(%arg0: i32) -> (i32, i32) {
    %c0_i32 = arith.constant 0 : i32
    %c0_i32_0 = arith.constant 0 : i32
    %c0_i32_1 = arith.constant 0 : i32
    return %c0_i32, %c0_i32_0 : i32, i32
  }
  func.func @transform_6(%arg0: i32) -> (i32, i32) {
    %c0_i32 = arith.constant 0 : i32
    %c0_i32_0 = arith.constant 0 : i32
    %c0_i32_1 = arith.constant 0 : i32
    return %c0_i32, %c0_i32_0 : i32, i32
  }
  func.func @transform_7(%arg0: i32) -> (i32, i32) {
    %c0_i32 = arith.constant 0 : i32
    %c0_i32_0 = arith.constant 0 : i32
    %c0_i32_1 = arith.constant 0 : i32
    return %c0_i32, %c0_i32_0 : i32, i32
  }
  func.func @transform_8(%arg0: i32) -> (i32, i32) {
    %c0_i32 = arith.constant 0 : i32
    %c0_i32_0 = arith.constant 0 : i32
    %c0_i32_1 = arith.constant 0 : i32
    return %c0_i32, %c0_i32_0 : i32, i32
  }
  func.func @transform_9(%arg0: i32) -> (i32, i32, i32) {
    %c0_i32 = arith.constant 0 : i32
    %c0_i32_0 = arith.constant 0 : i32
    %c0_i32_1 = arith.constant 0 : i32
    return %arg0, %c0_i32, %c0_i32_0 : i32, i32, i32
  }
}

</mosaic_0001>

<llo_original>
// kernel: tpu_custom_call.1
$region0: #{tpu_custom_call.1}
  #allocation0 [shape = 'u32[]', space=smem, size = 0x4, offset = 0x4, fixed_abs, tag = 'smem constant byte address 0x4 - core index']
  #allocation1 [shape = 'u32[144,128]{1,0:T(1,128)}', space=vmem, size = 0x12000, scoped, tag = 'internal scratch']
  #allocation2 [shape = 'f32[1,1]{1,0:T(1,128)S(6)}', space=smem, size = 0x200, scoped, tag = 'scoped memory for tpu_custom_call.1']
  %s0 = inlined_call_operand.vmem [shape: bf16[8,12], index: 0, kind: input, shape index: {}]
  %s1 = inlined_call_operand.vmem [shape: bf16[8,4], index: 1, kind: input, shape index: {}]
  %s2 = inlined_call_operand.hbm [shape: bf16[12,512], index: 2, kind: input, shape index: {}]
  %s3 = inlined_call_operand.vmem [shape: bf16[4,512], index: 3, kind: input, shape index: {}]
  %s4 = inlined_call_operand.vmem [shape: f32[1,512], index: 4, kind: input, shape index: {}]
  %s5 = inlined_call_operand.hbm [shape: bf16[512,384], index: 5, kind: input, shape index: {}]
  %s6 = inlined_call_operand.vmem [shape: f32[1,384], index: 6, kind: input, shape index: {}]
  %s7 = inlined_call_operand.vmem [shape: bf16[1,384], index: 7, kind: input, shape index: {}]
  %s8 = inlined_call_operand.<no memory space> [shape: f32[1,1], index: 8, kind: input, shape index: {}]
  %s9 = inlined_call_operand.hbm [shape: f32[1,1,8], index: 9, kind: output, shape index: {}]
  %s10 = sld [smem:[#allocation0]]
  $region54: #{tpu_custom_call.1} parent=0
    _
  %s12 = ssub.s32 1, %s10
  %s13 = scalar_select 0, %s12, %s10
  %14 = sst [smem:[#allocation2]] %s8
  $region1: #{tpu_custom_call.1} parent=0
    #allocation3 [shape = 'u8[16384]{0}', space=vmem, size = 0x4000, scoped, tag = 'input window, operand 2, single buffered']
    #allocation4 [shape = 's32[1]{0}', space=sflag, size = 0x4, scoped, tag = 'scoped memory for tpu_custom_call.1']
    #allocation5 [shape = 's32[1]{0}', space=sflag, size = 0x4, scoped, tag = 'scoped memory for tpu_custom_call.1']
    #allocation6 [shape = 'u8[393216]{0}', space=vmem, size = 0x60000, scoped, tag = 'input window, operand 5, single buffered']
    #allocation7 [shape = 's32[1]{0}', space=sflag, size = 0x4, scoped, tag = 'scoped memory for tpu_custom_call.1']
    #allocation8 [shape = 'u8[512]{0}', space=vmem, size = 0x400, scoped, tag = 'output window, operand 0, single buffered']
    %15 = vsyncpa [#allocation4], 0
    %16 = vsyncpa [#allocation7], 0
    %17 = vsyncpa [#allocation5], 0
    // Predicated region
    $region2: #{tpu_custom_call.1} parent=1 // pred_check
      _
    $region3: #{tpu_custom_call.1} parent=1 // pred_check_branch
      %19 = sbr.rel (0) target = $region5
    $region4: #{tpu_custom_call.1} parent=1 // pred_region
      _
    $region5: #{tpu_custom_call.1} parent=1 // pred_fallthru
      _
    // Predicated region
    $region6: #{tpu_custom_call.1} parent=1 // pred_check
      _
    $region7: #{tpu_custom_call.1} parent=1 // pred_check_branch
      %21 = sbr.rel (0) target = $region9
    $region8: #{tpu_custom_call.1} parent=1 // pred_region
      _
    $region9: #{tpu_custom_call.1} parent=1 // pred_fallthru
      _
    // Predicated region
    $region10: #{tpu_custom_call.1} parent=1 // pred_check
      _
    $region11: #{tpu_custom_call.1} parent=1 // pred_check_branch
      %23 = sbr.rel (0) target = $region13
    $region12: #{tpu_custom_call.1} parent=1 // pred_region
      %s25 = ssub.s32 512, 512
      %26 = vsyncadd [#allocation4], %s25
      %s27 = sshll.u32 [#allocation3], 4
      %s28 = int_to_ptr.vmem [resolvable:$true] %s27
      %33 = dma.hbm_to_vmem [thread:$0]  %s2, 512, %s28, [#allocation4], 256, 256, 16
    $region13: #{tpu_custom_call.1} parent=1 // pred_fallthru
      _
    // Predicated region
    $region14: #{tpu_custom_call.1} parent=1 // pred_check
      _
    $region15: #{tpu_custom_call.1} parent=1 // pred_check_branch
      %35 = sbr.rel (0) target = $region17
    $region16: #{tpu_custom_call.1} parent=1 // pred_region
      _
    $region17: #{tpu_custom_call.1} parent=1 // pred_fallthru
      _
    // Predicated region
    $region18: #{tpu_custom_call.1} parent=1 // pred_check
      _
    $region19: #{tpu_custom_call.1} parent=1 // pred_check_branch
      %37 = sbr.rel (0) target = $region21
    $region20: #{tpu_custom_call.1} parent=1 // pred_region
      _
    $region21: #{tpu_custom_call.1} parent=1 // pred_fallthru
      _
    // Predicated region
    $region22: #{tpu_custom_call.1} parent=1 // pred_check
      _
    $region23: #{tpu_custom_call.1} parent=1 // pred_check_branch
      %39 = sbr.rel (0) target = $region25
    $region24: #{tpu_custom_call.1} parent=1 // pred_region
      %s41 = ssub.s32 12288, 12288
      %42 = vsyncadd [#allocation7], %s41
      %s43 = sshll.u32 [#allocation6], 4
      %s44 = int_to_ptr.vmem [resolvable:$true] %s43
      %49 = dma.hbm_to_vmem [thread:$0]  %s5, 12288, %s44, [#allocation7], 192, 192, 12
    $region25: #{tpu_custom_call.1} parent=1 // pred_fallthru
      _
    // Predicated region
    $region26: #{tpu_custom_call.1} parent=1 // pred_check
      _
    $region27: #{tpu_custom_call.1} parent=1 // pred_check_branch
      %51 = sbr.rel (0) target = $region29
    $region28: #{tpu_custom_call.1} parent=1 // pred_region
      _
    $region29: #{tpu_custom_call.1} parent=1 // pred_fallthru
      _
    // Predicated region
    $region30: #{tpu_custom_call.1} parent=1 // pred_check
      _
    $region31: #{tpu_custom_call.1} parent=1 // pred_check_branch
      %53 = sbr.rel (0) target = $region33
    $region32: #{tpu_custom_call.1} parent=1 // pred_region
      _
    $region33: #{tpu_custom_call.1} parent=1 // pred_fallthru
      _
    // Predicated region
    $region34: #{tpu_custom_call.1} parent=1 // pred_check
      _
    $region35: #{tpu_custom_call.1} parent=1 // pred_check_branch
      %55 = sbr.rel (0) target = $region37
    $region36: #{tpu_custom_call.1} parent=1 // pred_region
      _
    $region37: #{tpu_custom_call.1} parent=1 // pred_fallthru
      _
    // Predicated region
    $region38: #{tpu_custom_call.1} parent=1 // pred_check
      _
    $region39: #{tpu_custom_call.1} parent=1 // pred_check_branch
      %57 = sbr.rel (0) target = $region41
    $region40: #{tpu_custom_call.1} parent=1 // pred_region
      %58 = dma.done [#allocation4], 512
    $region41: #{tpu_custom_call.1} parent=1 // pred_fallthru
      _
    // Predicated region
    $region42: #{tpu_custom_call.1} parent=1 // pred_check
      _
    $region43: #{tpu_custom_call.1} parent=1 // pred_check_branch
      %60 = sbr.rel (0) target = $region45
    $region44: #{tpu_custom_call.1} parent=1 // pred_region
      %61 = dma.done [#allocation7], 12288
    $region45: #{tpu_custom_call.1} parent=1 // pred_fallthru
      _
    %v63 = vld [vmem:[%s0] sm:$0xf]
    %v64 = vld [vmem:[#allocation3] sm:$0xff]
    %v65 = vld [vmem:[#allocation3 + $0x8] sm:$0xff]
    %v66 = vld [vmem:[#allocation3 + $0x10] sm:$0x33]
    %v67 = vld [vmem:[#allocation3 + $0x18] sm:$0x33]
    %v68 = vld [vmem:[%s1] sm:$0xf]
    %v69 = vld [vmem:[%s3] sm:$0xff]
    %v71 = vcombine.high %v69, %v69
    %v73 = vunpack.c.l.s4 1983009808
    %v74 = vunpack.c.0.s8 %v73
    %v75 = vlaneseq
    %v76 = vshrl.u32 %v75, 7
    %v77 = vsub.s32 %v74, %v76
    %v78 = vrot.slane %v69, %v77
    %v80 = vunpack.c.l.s4 1983009808
    %v81 = vunpack.c.0.s8 %v80
    %v82 = vlaneseq
    %v83 = vshrl.u32 %v82, 7
    %v84 = vsub.s32 %v81, %v83
    %v85 = vrot.slane %v71, %v84
    %v86 = vcombine.high %v78, %v78
    %v87 = vcombine.high %v85, %v85
    %vm88 = vcmask 31744
    %v90 = vsel %vm88, %v68, 0
    %vm92 = vcmask 1041408
    %v94 = vsel %vm92, %v78, 0
    %v97 = vsel %vm92, %v86, 0
    %v100 = vsel %vm92, %v85, 0
    %v103 = vsel %vm92, %v87, 0
    %105 = vmatprep.subr.bf16.mxu0 %v97
    %106 = vmatpush1.bf16.msra.mxu0 %v94
    %107 = vmatprep.subr.bf16.mxu0 0
    %108 = vmatpush1.bf16.msra.mxu0 0
    %109 = vmatprep.subr.bf16.mxu0 0
    %110 = vmatpush1.bf16.msra.mxu0 0
    %111 = vmatprep.subr.bf16.mxu0 0
    %112 = vmatpush1.bf16.msra.mxu0 0
    %113 = vmatprep.subr.bf16.mxu0 0
    %114 = vmatpush1.bf16.msra.mxu0 0
    %115 = vmatprep.subr.bf16.mxu0 0
    %116 = vmatpush1.bf16.msra.mxu0 0
    %117 = vmatprep.subr.bf16.mxu0 0
    %118 = vmatpush1.bf16.msra.mxu0 0
    %119 = vmatprep.subr.bf16.mxu0 0
    %120 = vmatpush1.bf16.msra.mxu0 0
    %121 = vmatprep.subr.bf16.mxu0 0
    %122 = vmatpush1.bf16.msra.mxu0 0
    %123 = vmatprep.subr.bf16.mxu0 0
    %124 = vmatpush1.bf16.msra.mxu0 0
    %125 = vmatprep.subr.bf16.mxu0 0
    %126 = vmatpush1.bf16.msra.mxu0 0
    %127 = vmatprep.subr.bf16.mxu0 0
    %128 = vmatpush1.bf16.msra.mxu0 0
    %129 = vmatprep.subr.bf16.mxu0 0
    %130 = vmatpush1.bf16.msra.mxu0 0
    %131 = vmatprep.subr.bf16.mxu0 0
    %132 = vmatpush1.bf16.msra.mxu0 0
    %133 = vmatprep.subr.bf16.mxu0 0
    %134 = vmatpush1.bf16.msra.mxu0 0
    %135 = vmatprep.subr.bf16.mxu0 0
    %136 = vmatpush1.bf16.msra.mxu0 0
    %137 = vmatprep.mubr.bf16.mxu0 0
    %138 = vmatmul.mubr.bf16.gmra.mrb[0].mxu0 %v90
    %v139 = vpop.f32.mrb[0].mxu0
    %v140 = vadd.f32 0.0, %v139
    %v141 = vpop.f32.mrb[0].mxu0
    %v142 = vadd.f32 0.0, %v141
    %v143 = vpop.f32.mrb[0].mxu0
    %v144 = vpop.f32.mrb[0].mxu0
    %145 = vdwg.mxu0
    %146 = vmatprep.subr.bf16.mxu0 %v103
    %147 = vmatpush1.bf16.msra.mxu0 %v100
    %148 = vmatprep.subr.bf16.mxu0 0
    %149 = vmatpush1.bf16.msra.mxu0 0
    %150 = vmatprep.subr.bf16.mxu0 0
    %151 = vmatpush1.bf16.msra.mxu0 0
    %152 = vmatprep.subr.bf16.mxu0 0
    %153 = vmatpush1.bf16.msra.mxu0 0
    %154 = vmatprep.subr.bf16.mxu0 0
    %155 = vmatpush1.bf16.msra.mxu0 0
    %156 = vmatprep.subr.bf16.mxu0 0
    %157 = vmatpush1.bf16.msra.mxu0 0
    %158 = vmatprep.subr.bf16.mxu0 0
    %159 = vmatpush1.bf16.msra.mxu0 0
    %160 = vmatprep.subr.bf16.mxu0 0
    %161 = vmatpush1.bf16.msra.mxu0 0
    %162 = vmatprep.subr.bf16.mxu0 0
    %163 = vmatpush1.bf16.msra.mxu0 0
    %164 = vmatprep.subr.bf16.mxu0 0
    %165 = vmatpush1.bf16.msra.mxu0 0
    %166 = vmatprep.subr.bf16.mxu0 0
    %167 = vmatpush1.bf16.msra.mxu0 0
    %168 = vmatprep.subr.bf16.mxu0 0
    %169 = vmatpush1.bf16.msra.mxu0 0
    %170 = vmatprep.subr.bf16.mxu0 0
    %171 = vmatpush1.bf16.msra.mxu0 0
    %172 = vmatprep.subr.bf16.mxu0 0
    %173 = vmatpush1.bf16.msra.mxu0 0
    %174 = vmatprep.subr.bf16.mxu0 0
    %175 = vmatpush1.bf16.msra.mxu0 0
    %176 = vmatprep.subr.bf16.mxu0 0
    %177 = vmatpush1.bf16.msra.mxu0 0
    %178 = vmatprep.mubr.bf16.mxu0 0
    %179 = vmatmul.mubr.bf16.gmra.mrb[0].mxu0 %v90
    %v180 = vpop.f32.mrb[0].mxu0
    %v181 = vadd.f32 0.0, %v180
    %v182 = vpop.f32.mrb[0].mxu0
    %v183 = vadd.f32 0.0, %v182
    %v184 = vpop.f32.mrb[0].mxu0
    %v185 = vpop.f32.mrb[0].mxu0
    %186 = vdwg.mxu0
    %v191 = vunpack.c.l.b16 %v64
    %v192 = vunpack.c.h.b16 %v64
    %v193 = vunpack.c.l.b16 %v65
    %v194 = vunpack.c.h.b16 %v65
    %v195 = vunpack.c.l.b16 %v66
    %v196 = vunpack.c.h.b16 %v66
    %v197 = vunpack.c.l.b16 %v67
    %v198 = vunpack.c.h.b16 %v67
    %v199 = vpack.c.b16 %v195, %v191
    %v200 = vpack.c.b16 %v196, %v192
    %v201 = vpack.c.b16 %v197, %v193
    %v202 = vpack.c.b16 %v198, %v194
    %vm203 = vcmask 97280
    %v205 = vsel %vm203, %v63, 0
    %vm207 = vcmask 1045504
    %v209 = vsel %vm207, %v199, 0
    %v212 = vsel %vm207, %v200, 0
    %v215 = vsel %vm207, %v201, 0
    %v218 = vsel %vm207, %v202, 0
    %220 = vmatprep.subr.bf16.mxu0 %v212
    %221 = vmatpush1.bf16.msra.mxu0 %v209
    %222 = vmatprep.subr.bf16.mxu0 0
    %223 = vmatpush1.bf16.msra.mxu0 0
    %224 = vmatprep.subr.bf16.mxu0 0
    %225 = vmatpush1.bf16.msra.mxu0 0
    %226 = vmatprep.subr.bf16.mxu0 0
    %227 = vmatpush1.bf16.msra.mxu0 0
    %228 = vmatprep.subr.bf16.mxu0 0
    %229 = vmatpush1.bf16.msra.mxu0 0
    %230 = vmatprep.subr.bf16.mxu0 0
    %231 = vmatpush1.bf16.msra.mxu0 0
    %232 = vmatprep.subr.bf16.mxu0 0
    %233 = vmatpush1.bf16.msra.mxu0 0
    %234 = vmatprep.subr.bf16.mxu0 0
    %235 = vmatpush1.bf16.msra.mxu0 0
    %236 = vmatprep.subr.bf16.mxu0 0
    %237 = vmatpush1.bf16.msra.mxu0 0
    %238 = vmatprep.subr.bf16.mxu0 0
    %239 = vmatpush1.bf16.msra.mxu0 0
    %240 = vmatprep.subr.bf16.mxu0 0
    %241 = vmatpush1.bf16.msra.mxu0 0
    %242 = vmatprep.subr.bf16.mxu0 0
    %243 = vmatpush1.bf16.msra.mxu0 0
    %244 = vmatprep.subr.bf16.mxu0 0
    %245 = vmatpush1.bf16.msra.mxu0 0
    %246 = vmatprep.subr.bf16.mxu0 0
    %247 = vmatpush1.bf16.msra.mxu0 0
    %248 = vmatprep.subr.bf16.mxu0 0
    %249 = vmatpush1.bf16.msra.mxu0 0
    %250 = vmatprep.subr.bf16.mxu0 0
    %251 = vmatpush1.bf16.msra.mxu0 0
    %252 = vmatprep.mubr.bf16.mxu0 0
    %253 = vmatmul.mubr.bf16.gmra.mrb[0].mxu0 %v205
    %v254 = vpop.f32.mrb[0].mxu0
    %v255 = vadd.f32 %v140, %v254
    %v256 = vpop.f32.mrb[0].mxu0
    %v257 = vadd.f32 %v142, %v256
    %v258 = vpop.f32.mrb[0].mxu0
    %v259 = vpop.f32.mrb[0].mxu0
    %260 = vdwg.mxu0
    %261 = vmatprep.subr.bf16.mxu0 %v218
    %262 = vmatpush1.bf16.msra.mxu0 %v215
    %263 = vmatprep.subr.bf16.mxu0 0
    %264 = vmatpush1.bf16.msra.mxu0 0
    %265 = vmatprep.subr.bf16.mxu0 0
    %266 = vmatpush1.bf16.msra.mxu0 0
    %267 = vmatprep.subr.bf16.mxu0 0
    %268 = vmatpush1.bf16.msra.mxu0 0
    %269 = vmatprep.subr.bf16.mxu0 0
    %270 = vmatpush1.bf16.msra.mxu0 0
    %271 = vmatprep.subr.bf16.mxu0 0
    %272 = vmatpush1.bf16.msra.mxu0 0
    %273 = vmatprep.subr.bf16.mxu0 0
    %274 = vmatpush1.bf16.msra.mxu0 0
    %275 = vmatprep.subr.bf16.mxu0 0
    %276 = vmatpush1.bf16.msra.mxu0 0
    %277 = vmatprep.subr.bf16.mxu0 0
    %278 = vmatpush1.bf16.msra.mxu0 0
    %279 = vmatprep.subr.bf16.mxu0 0
    %280 = vmatpush1.bf16.msra.mxu0 0
    %281 = vmatprep.subr.bf16.mxu0 0
    %282 = vmatpush1.bf16.msra.mxu0 0
    %283 = vmatprep.subr.bf16.mxu0 0
    %284 = vmatpush1.bf16.msra.mxu0 0
    %285 = vmatprep.subr.bf16.mxu0 0
    %286 = vmatpush1.bf16.msra.mxu0 0
    %287 = vmatprep.subr.bf16.mxu0 0
    %288 = vmatpush1.bf16.msra.mxu0 0
    %289 = vmatprep.subr.bf16.mxu0 0
    %290 = vmatpush1.bf16.msra.mxu0 0
    %291 = vmatprep.subr.bf16.mxu0 0
    %292 = vmatpush1.bf16.msra.mxu0 0
    %293 = vmatprep.mubr.bf16.mxu0 0
    %294 = vmatmul.mubr.bf16.gmra.mrb[0].mxu0 %v205
    %v295 = vpop.f32.mrb[0].mxu0
    %v296 = vadd.f32 %v181, %v295
    %v297 = vpop.f32.mrb[0].mxu0
    %v298 = vadd.f32 %v183, %v297
    %v299 = vpop.f32.mrb[0].mxu0
    %v300 = vpop.f32.mrb[0].mxu0
    %301 = vdwg.mxu0
    %v302 = vld [vmem:[%s4] sm:$0xf]
    %v304 = vlaneseq
    %v305 = vshrl.u32 %v304, 7
    %v306 = vsub.s32 0, %v305
    %v307 = vrot.slane %v302, %v306
    %v308 = vlaneseq
    %v309 = vshrl.u32 %v308, 7
    %v310 = vsub.s32 1, %v309
    %v311 = vrot.slane %v302, %v310
    %v312 = vlaneseq
    %v313 = vshrl.u32 %v312, 7
    %v314 = vsub.s32 2, %v313
    %v315 = vrot.slane %v302, %v314
    %v316 = vlaneseq
    %v317 = vshrl.u32 %v316, 7
    %v318 = vsub.s32 3, %v317
    %v319 = vrot.slane %v302, %v318
    %v324 = vadd.f32 %v255, %v307
    %v325 = vadd.f32 %v257, %v311
    %v326 = vadd.f32 %v296, %v315
    %v327 = vadd.f32 %v298, %v319
    %v328 = vmax.f32 %v324, 0.0
    %v329 = vmax.f32 %v325, 0.0
    %v330 = vmax.f32 %v326, 0.0
    %v331 = vmax.f32 %v327, 0.0
    %v332 = vpack.c.bf16 %v328, %v328
    %v333 = vpack.c.bf16 %v329, %v329
    %v334 = vpack.c.bf16 %v330, %v330
    %v335 = vpack.c.bf16 %v331, %v331
    %v336 = vld [vmem:[#allocation6] sm:$0xff]
    %v337 = vld [vmem:[#allocation6 + $0x8] sm:$0xf]
    %v338 = vld [vmem:[#allocation6 + $0xc] sm:$0xff]
    %v339 = vld [vmem:[#allocation6 + $0x14] sm:$0xf]
    %v340 = vld [vmem:[#allocation6 + $0x18] sm:$0xff]
    %v341 = vld [vmem:[#allocation6 + $0x20] sm:$0xf]
    %v342 = vld [vmem:[#allocation6 + $0x24] sm:$0xff]
    %v343 = vld [vmem:[#allocation6 + $0x2c] sm:$0xf]
    %v344 = vld [vmem:[#allocation6 + $0x30] sm:$0xff]
    %v345 = vld [vmem:[#allocation6 + $0x38] sm:$0xf]
    %v346 = vld [vmem:[#allocation6 + $0x3c] sm:$0xff]
    %v347 = vld [vmem:[#allocation6 + $0x44] sm:$0xf]
    %v348 = vld [vmem:[#allocation6 + $0x48] sm:$0xff]
    %v349 = vld [vmem:[#allocation6 + $0x50] sm:$0xf]
    %v350 = vld [vmem:[#allocation6 + $0x54] sm:$0xff]
    %v351 = vld [vmem:[#allocation6 + $0x5c] sm:$0xf]
    %v352 = vld [vmem:[#allocation6 + $0x60] sm:$0xff]
    %v353 = vld [vmem:[#allocation6 + $0x68] sm:$0xf]
    %v354 = vld [vmem:[#allocation6 + $0x6c] sm:$0xff]
    %v355 = vld [vmem:[#allocation6 + $0x74] sm:$0xf]
    %v356 = vld [vmem:[#allocation6 + $0x78] sm:$0xff]
    %v357 = vld [vmem:[#allocation6 + $0x80] sm:$0xf]
    %v358 = vld [vmem:[#allocation6 + $0x84] sm:$0xff]
    %v359 = vld [vmem:[#allocation6 + $0x8c] sm:$0xf]
    %v360 = vld [vmem:[#allocation6 + $0x90] sm:$0xff]
    %v361 = vld [vmem:[#allocation6 + $0x98] sm:$0xf]
    %v362 = vld [vmem:[#allocation6 + $0x9c] sm:$0xff]
    %v363 = vld [vmem:[#allocation6 + $0xa4] sm:$0xf]
    %v364 = vld [vmem:[#allocation6 + $0xa8] sm:$0xff]
    %v365 = vld [vmem:[#allocation6 + $0xb0] sm:$0xf]
    %v366 = vld [vmem:[#allocation6 + $0xb4] sm:$0xff]
    %v367 = vld [vmem:[#allocation6 + $0xbc] sm:$0xf]
    %v368 = vld [vmem:[#allocation6 + $0xc0] sm:$0xff]
    %v369 = vld [vmem:[#allocation6 + $0xc8] sm:$0xf]
    %v370 = vld [vmem:[#allocation6 + $0xcc] sm:$0xff]
    %v371 = vld [vmem:[#allocation6 + $0xd4] sm:$0xf]
    %v372 = vld [vmem:[#allocation6 + $0xd8] sm:$0xff]
    %v373 = vld [vmem:[#allocation6 + $0xe0] sm:$0xf]
    %v374 = vld [vmem:[#allocation6 + $0xe4] sm:$0xff]
    %v375 = vld [vmem:[#allocation6 + $0xec] sm:$0xf]
    %v376 = vld [vmem:[#allocation6 + $0xf0] sm:$0xff]
    %v377 = vld [vmem:[#allocation6 + $0xf8] sm:$0xf]
    %v378 = vld [vmem:[#allocation6 + $0xfc] sm:$0xff]
    %v379 = vld [vmem:[#allocation6 + $0x104] sm:$0xf]
    %v380 = vld [vmem:[#allocation6 + $0x108] sm:$0xff]
    %v381 = vld [vmem:[#allocation6 + $0x110] sm:$0xf]
    %v382 = vld [vmem:[#allocation6 + $0x114] sm:$0xff]
    %v383 = vld [vmem:[#allocation6 + $0x11c] sm:$0xf]
    %v384 = vld [vmem:[#allocation6 + $0x120] sm:$0xff]
    %v385 = vld [vmem:[#allocation6 + $0x128] sm:$0xf]
    %v386 = vld [vmem:[#allocation6 + $0x12c] sm:$0xff]
    %v387 = vld [vmem:[#allocation6 + $0x134] sm:$0xf]
    %v388 = vld [vmem:[#allocation6 + $0x138] sm:$0xff]
    %v389 = vld [vmem:[#allocation6 + $0x140] sm:$0xf]
    %v390 = vld [vmem:[#allocation6 + $0x144] sm:$0xff]
    %v391 = vld [vmem:[#allocation6 + $0x14c] sm:$0xf]
    %v392 = vld [vmem:[#allocation6 + $0x150] sm:$0xff]
    %v393 = vld [vmem:[#allocation6 + $0x158] sm:$0xf]
    %v394 = vld [vmem:[#allocation6 + $0x15c] sm:$0xff]
    %v395 = vld [vmem:[#allocation6 + $0x164] sm:$0xf]
    %v396 = vld [vmem:[#allocation6 + $0x168] sm:$0xff]
    %v397 = vld [vmem:[#allocation6 + $0x170] sm:$0xf]
    %v398 = vld [vmem:[#allocation6 + $0x174] sm:$0xff]
    %v399 = vld [vmem:[#allocation6 + $0x17c] sm:$0xf]
    %v400 = vld [vmem:[#allocation6 + $0x180] sm:$0xff]
    %v401 = vld [vmem:[#allocation6 + $0x188] sm:$0xf]
    %v402 = vld [vmem:[#allocation6 + $0x18c] sm:$0xff]
    %v403 = vld [vmem:[#allocation6 + $0x194] sm:$0xf]
    %v404 = vld [vmem:[#allocation6 + $0x198] sm:$0xff]
    %v405 = vld [vmem:[#allocation6 + $0x1a0] sm:$0xf]
    %v406 = vld [vmem:[#allocation6 + $0x1a4] sm:$0xff]
    %v407 = vld [vmem:[#allocation6 + $0x1ac] sm:$0xf]
    %v408 = vld [vmem:[#allocation6 + $0x1b0] sm:$0xff]
    %v409 = vld [vmem:[#allocation6 + $0x1b8] sm:$0xf]
    %v410 = vld [vmem:[#allocation6 + $0x1bc] sm:$0xff]
    %v411 = vld [vmem:[#allocation6 + $0x1c4] sm:$0xf]
    %v412 = vld [vmem:[#allocation6 + $0x1c8] sm:$0xff]
    %v413 = vld [vmem:[#allocation6 + $0x1d0] sm:$0xf]
    %v414 = vld [vmem:[#allocation6 + $0x1d4] sm:$0xff]
    %v415 = vld [vmem:[#allocation6 + $0x1dc] sm:$0xf]
    %v416 = vld [vmem:[#allocation6 + $0x1e0] sm:$0xff]
    %v417 = vld [vmem:[#allocation6 + $0x1e8] sm:$0xf]
    %v418 = vld [vmem:[#allocation6 + $0x1ec] sm:$0xff]
    %v419 = vld [vmem:[#allocation6 + $0x1f4] sm:$0xf]
    %v420 = vld [vmem:[#allocation6 + $0x1f8] sm:$0xff]
    %v421 = vld [vmem:[#allocation6 + $0x200] sm:$0xf]
    %v422 = vld [vmem:[#allocation6 + $0x204] sm:$0xff]
    %v423 = vld [vmem:[#allocation6 + $0x20c] sm:$0xf]
    %v424 = vld [vmem:[#allocation6 + $0x210] sm:$0xff]
    %v425 = vld [vmem:[#allocation6 + $0x218] sm:$0xf]
    %v426 = vld [vmem:[#allocation6 + $0x21c] sm:$0xff]
    %v427 = vld [vmem:[#allocation6 + $0x224] sm:$0xf]
    %v428 = vld [vmem:[#allocation6 + $0x228] sm:$0xff]
    %v429 = vld [vmem:[#allocation6 + $0x230] sm:$0xf]
    %v430 = vld [vmem:[#allocation6 + $0x234] sm:$0xff]
    %v431 = vld [vmem:[#allocation6 + $0x23c] sm:$0xf]
    %v432 = vld [vmem:[#allocation6 + $0x240] sm:$0xff]
    %v433 = vld [vmem:[#allocation6 + $0x248] sm:$0xf]
    %v434 = vld [vmem:[#allocation6 + $0x24c] sm:$0xff]
    %v435 = vld [vmem:[#allocation6 + $0x254] sm:$0xf]
    %v436 = vld [vmem:[#allocation6 + $0x258] sm:$0xff]
    %v437 = vld [vmem:[#allocation6 + $0x260] sm:$0xf]
    %v438 = vld [vmem:[#allocation6 + $0x264] sm:$0xff]
    %v439 = vld [vmem:[#allocation6 + $0x26c] sm:$0xf]
    %v440 = vld [vmem:[#allocation6 + $0x270] sm:$0xff]
    %v441 = vld [vmem:[#allocation6 + $0x278] sm:$0xf]
    %v442 = vld [vmem:[#allocation6 + $0x27c] sm:$0xff]
    %v443 = vld [vmem:[#allocation6 + $0x284] sm:$0xf]
    %v444 = vld [vmem:[#allocation6 + $0x288] sm:$0xff]
    %v445 = vld [vmem:[#allocation6 + $0x290] sm:$0xf]
    %v446 = vld [vmem:[#allocation6 + $0x294] sm:$0xff]
    %v447 = vld [vmem:[#allocation6 + $0x29c] sm:$0xf]
    %v448 = vld [vmem:[#allocation6 + $0x2a0] sm:$0xff]
    %v449 = vld [vmem:[#allocation6 + $0x2a8] sm:$0xf]
    %v450 = vld [vmem:[#allocation6 + $0x2ac] sm:$0xff]
    %v451 = vld [vmem:[#allocation6 + $0x2b4] sm:$0xf]
    %v452 = vld [vmem:[#allocation6 + $0x2b8] sm:$0xff]
    %v453 = vld [vmem:[#allocation6 + $0x2c0] sm:$0xf]
    %v454 = vld [vmem:[#allocation6 + $0x2c4] sm:$0xff]
    %v455 = vld [vmem:[#allocation6 + $0x2cc] sm:$0xf]
    %v456 = vld [vmem:[#allocation6 + $0x2d0] sm:$0xff]
    %v457 = vld [vmem:[#allocation6 + $0x2d8] sm:$0xf]
    %v458 = vld [vmem:[#allocation6 + $0x2dc] sm:$0xff]
    %v459 = vld [vmem:[#allocation6 + $0x2e4] sm:$0xf]
    %v460 = vld [vmem:[#allocation6 + $0x2e8] sm:$0xff]
    %v461 = vld [vmem:[#allocation6 + $0x2f0] sm:$0xf]
    %v462 = vld [vmem:[#allocation6 + $0x2f4] sm:$0xff]
    %v463 = vld [vmem:[#allocation6 + $0x2fc] sm:$0xf]
    %v464 = vld [vmem:[%s6] sm:$0x7]
    %v466 = vlaneseq
    %v467 = vshrl.u32 %v466, 7
    %v468 = vsub.s32 0, %v467
    %v469 = vrot.slane %v464, %v468
    %v470 = vlaneseq
    %v471 = vshrl.u32 %v470, 7
    %v472 = vsub.s32 1, %v471
    %v473 = vrot.slane %v464, %v472
    %v474 = vlaneseq
    %v475 = vshrl.u32 %v474, 7
    %v476 = vsub.s32 2, %v475
    %v477 = vrot.slane %v464, %v476
    %v609 = vunpack.c.l.b16 %v336
    %v610 = vunpack.c.h.b16 %v336
    %v611 = vunpack.c.l.b16 %v337
    %v612 = vunpack.c.l.b16 %v338
    %v613 = vunpack.c.h.b16 %v338
    %v614 = vunpack.c.l.b16 %v339
    %v615 = vunpack.c.l.b16 %v340
    %v616 = vunpack.c.h.b16 %v340
    %v617 = vunpack.c.l.b16 %v341
    %v618 = vunpack.c.l.b16 %v342
    %v619 = vunpack.c.h.b16 %v342
    %v620 = vunpack.c.l.b16 %v343
    %v621 = vunpack.c.l.b16 %v344
    %v622 = vunpack.c.h.b16 %v344
    %v623 = vunpack.c.l.b16 %v345
    %v624 = vunpack.c.l.b16 %v346
    %v625 = vunpack.c.h.b16 %v346
    %v626 = vunpack.c.l.b16 %v347
    %v627 = vunpack.c.l.b16 %v348
    %v628 = vunpack.c.h.b16 %v348
    %v629 = vunpack.c.l.b16 %v349
    %v630 = vunpack.c.l.b16 %v350
    %v631 = vunpack.c.h.b16 %v350
    %v632 = vunpack.c.l.b16 %v351
    %v633 = vunpack.c.l.b16 %v352
    %v634 = vunpack.c.h.b16 %v352
    %v635 = vunpack.c.l.b16 %v353
    %v636 = vunpack.c.l.b16 %v354
    %v637 = vunpack.c.h.b16 %v354
    %v638 = vunpack.c.l.b16 %v355
    %v639 = vunpack.c.l.b16 %v356
    %v640 = vunpack.c.h.b16 %v356
    %v641 = vunpack.c.l.b16 %v357
    %v642 = vunpack.c.l.b16 %v358
    %v643 = vunpack.c.h.b16 %v358
    %v644 = vunpack.c.l.b16 %v359
    %v645 = vunpack.c.l.b16 %v360
    %v646 = vunpack.c.h.b16 %v360
    %v647 = vunpack.c.l.b16 %v361
    %v648 = vunpack.c.l.b16 %v362
    %v649 = vunpack.c.h.b16 %v362
    %v650 = vunpack.c.l.b16 %v363
    %v651 = vunpack.c.l.b16 %v364
    %v652 = vunpack.c.h.b16 %v364
    %v653 = vunpack.c.l.b16 %v365
    %v654 = vunpack.c.l.b16 %v366
    %v655 = vunpack.c.h.b16 %v366
    %v656 = vunpack.c.l.b16 %v367
    %v657 = vunpack.c.l.b16 %v368
    %v658 = vunpack.c.h.b16 %v368
    %v659 = vunpack.c.l.b16 %v369
    %v660 = vunpack.c.l.b16 %v370
    %v661 = vunpack.c.h.b16 %v370
    %v662 = vunpack.c.l.b16 %v371
    %v663 = vunpack.c.l.b16 %v372
    %v664 = vunpack.c.h.b16 %v372
    %v665 = vunpack.c.l.b16 %v373
    %v666 = vunpack.c.l.b16 %v374
    %v667 = vunpack.c.h.b16 %v374
    %v668 = vunpack.c.l.b16 %v375
    %v669 = vunpack.c.l.b16 %v376
    %v670 = vunpack.c.h.b16 %v376
    %v671 = vunpack.c.l.b16 %v377
    %v672 = vunpack.c.l.b16 %v378
    %v673 = vunpack.c.h.b16 %v378
    %v674 = vunpack.c.l.b16 %v379
    %v675 = vunpack.c.l.b16 %v380
    %v676 = vunpack.c.h.b16 %v380
    %v677 = vunpack.c.l.b16 %v381
    %v678 = vunpack.c.l.b16 %v382
    %v679 = vunpack.c.h.b16 %v382
    %v680 = vunpack.c.l.b16 %v383
    %v681 = vunpack.c.l.b16 %v384
    %v682 = vunpack.c.h.b16 %v384
    %v683 = vunpack.c.l.b16 %v385
    %v684 = vunpack.c.l.b16 %v386
    %v685 = vunpack.c.h.b16 %v386
    %v686 = vunpack.c.l.b16 %v387
    %v687 = vunpack.c.l.b16 %v388
    %v688 = vunpack.c.h.b16 %v388
    %v689 = vunpack.c.l.b16 %v389
    %v690 = vunpack.c.l.b16 %v390
    %v691 = vunpack.c.h.b16 %v390
    %v692 = vunpack.c.l.b16 %v391
    %v693 = vunpack.c.l.b16 %v392
    %v694 = vunpack.c.h.b16 %v392
    %v695 = vunpack.c.l.b16 %v393
    %v696 = vunpack.c.l.b16 %v394
    %v697 = vunpack.c.h.b16 %v394
    %v698 = vunpack.c.l.b16 %v395
    %v699 = vunpack.c.l.b16 %v396
    %v700 = vunpack.c.h.b16 %v396
    %v701 = vunpack.c.l.b16 %v397
    %v702 = vunpack.c.l.b16 %v398
    %v703 = vunpack.c.h.b16 %v398
    %v704 = vunpack.c.l.b16 %v399
    %v705 = vunpack.c.l.b16 %v400
    %v706 = vunpack.c.h.b16 %v400
    %v707 = vunpack.c.l.b16 %v401
    %v708 = vunpack.c.l.b16 %v402
    %v709 = vunpack.c.h.b16 %v402
    %v710 = vunpack.c.l.b16 %v403
    %v711 = vunpack.c.l.b16 %v404
    %v712 = vunpack.c.h.b16 %v404
    %v713 = vunpack.c.l.b16 %v405
    %v714 = vunpack.c.l.b16 %v406
    %v715 = vunpack.c.h.b16 %v406
    %v716 = vunpack.c.l.b16 %v407
    %v717 = vunpack.c.l.b16 %v408
    %v718 = vunpack.c.h.b16 %v408
    %v719 = vunpack.c.l.b16 %v409
    %v720 = vunpack.c.l.b16 %v410
    %v721 = vunpack.c.h.b16 %v410
    %v722 = vunpack.c.l.b16 %v411
    %v723 = vunpack.c.l.b16 %v412
    %v724 = vunpack.c.h.b16 %v412
    %v725 = vunpack.c.l.b16 %v413
    %v726 = vunpack.c.l.b16 %v414
    %v727 = vunpack.c.h.b16 %v414
    %v728 = vunpack.c.l.b16 %v415
    %v729 = vunpack.c.l.b16 %v416
    %v730 = vunpack.c.h.b16 %v416
    %v731 = vunpack.c.l.b16 %v417
    %v732 = vunpack.c.l.b16 %v418
    %v733 = vunpack.c.h.b16 %v418
    %v734 = vunpack.c.l.b16 %v419
    %v735 = vunpack.c.l.b16 %v420
    %v736 = vunpack.c.h.b16 %v420
    %v737 = vunpack.c.l.b16 %v421
    %v738 = vunpack.c.l.b16 %v422
    %v739 = vunpack.c.h.b16 %v422
    %v740 = vunpack.c.l.b16 %v423
    %v741 = vunpack.c.l.b16 %v424
    %v742 = vunpack.c.h.b16 %v424
    %v743 = vunpack.c.l.b16 %v425
    %v744 = vunpack.c.l.b16 %v426
    %v745 = vunpack.c.h.b16 %v426
    %v746 = vunpack.c.l.b16 %v427
    %v747 = vunpack.c.l.b16 %v428
    %v748 = vunpack.c.h.b16 %v428
    %v749 = vunpack.c.l.b16 %v429
    %v750 = vunpack.c.l.b16 %v430
    %v751 = vunpack.c.h.b16 %v430
    %v752 = vunpack.c.l.b16 %v431
    %v753 = vunpack.c.l.b16 %v432
    %v754 = vunpack.c.h.b16 %v432
    %v755 = vunpack.c.l.b16 %v433
    %v756 = vunpack.c.l.b16 %v434
    %v757 = vunpack.c.h.b16 %v434
    %v758 = vunpack.c.l.b16 %v435
    %v759 = vunpack.c.l.b16 %v436
    %v760 = vunpack.c.h.b16 %v436
    %v761 = vunpack.c.l.b16 %v437
    %v762 = vunpack.c.l.b16 %v438
    %v763 = vunpack.c.h.b16 %v438
    %v764 = vunpack.c.l.b16 %v439
    %v765 = vunpack.c.l.b16 %v440
    %v766 = vunpack.c.h.b16 %v440
    %v767 = vunpack.c.l.b16 %v441
    %v768 = vunpack.c.l.b16 %v442
    %v769 = vunpack.c.h.b16 %v442
    %v770 = vunpack.c.l.b16 %v443
    %v771 = vunpack.c.l.b16 %v444
    %v772 = vunpack.c.h.b16 %v444
    %v773 = vunpack.c.l.b16 %v445
    %v774 = vunpack.c.l.b16 %v446
    %v775 = vunpack.c.h.b16 %v446
    %v776 = vunpack.c.l.b16 %v447
    %v777 = vunpack.c.l.b16 %v448
    %v778 = vunpack.c.h.b16 %v448
    %v779 = vunpack.c.l.b16 %v449
    %v780 = vunpack.c.l.b16 %v450
    %v781 = vunpack.c.h.b16 %v450
    %v782 = vunpack.c.l.b16 %v451
    %v783 = vunpack.c.l.b16 %v452
    %v784 = vunpack.c.h.b16 %v452
    %v785 = vunpack.c.l.b16 %v453
    %v786 = vunpack.c.l.b16 %v454
    %v787 = vunpack.c.h.b16 %v454
    %v788 = vunpack.c.l.b16 %v455
    %v789 = vunpack.c.l.b16 %v456
    %v790 = vunpack.c.h.b16 %v456
    %v791 = vunpack.c.l.b16 %v457
    %v792 = vunpack.c.l.b16 %v458
    %v793 = vunpack.c.h.b16 %v458
    %v794 = vunpack.c.l.b16 %v459
    %v795 = vunpack.c.l.b16 %v460
    %v796 = vunpack.c.h.b16 %v460
    %v797 = vunpack.c.l.b16 %v461
    %v798 = vunpack.c.l.b16 %v462
    %v799 = vunpack.c.h.b16 %v462
    %v800 = vunpack.c.l.b16 %v463
    %v801 = vpack.c.b16 %v612, %v609
    %v802 = vpack.c.b16 %v613, %v610
    %v803 = vpack.c.b16 %v614, %v611
    %v804 = vpack.c.b16 %v618, %v615
    %v805 = vpack.c.b16 %v619, %v616
    %v806 = vpack.c.b16 %v620, %v617
    %v807 = vpack.c.b16 %v624, %v621
    %v808 = vpack.c.b16 %v625, %v622
    %v809 = vpack.c.b16 %v626, %v623
    %v810 = vpack.c.b16 %v630, %v627
    %v811 = vpack.c.b16 %v631, %v628
    %v812 = vpack.c.b16 %v632, %v629
    %v813 = vpack.c.b16 %v636, %v633
    %v814 = vpack.c.b16 %v637, %v634
    %v815 = vpack.c.b16 %v638, %v635
    %v816 = vpack.c.b16 %v642, %v639
    %v817 = vpack.c.b16 %v643, %v640
    %v818 = vpack.c.b16 %v644, %v641
    %v819 = vpack.c.b16 %v648, %v645
    %v820 = vpack.c.b16 %v649, %v646
    %v821 = vpack.c.b16 %v650, %v647
    %v822 = vpack.c.b16 %v654, %v651
    %v823 = vpack.c.b16 %v655, %v652
    %v824 = vpack.c.b16 %v656, %v653
    %v825 = vpack.c.b16 %v660, %v657
    %v826 = vpack.c.b16 %v661, %v658
    %v827 = vpack.c.b16 %v662, %v659
    %v828 = vpack.c.b16 %v666, %v663
    %v829 = vpack.c.b16 %v667, %v664
    %v830 = vpack.c.b16 %v668, %v665
    %v831 = vpack.c.b16 %v672, %v669
    %v832 = vpack.c.b16 %v673, %v670
    %v833 = vpack.c.b16 %v674, %v671
    %v834 = vpack.c.b16 %v678, %v675
    %v835 = vpack.c.b16 %v679, %v676
    %v836 = vpack.c.b16 %v680, %v677
    %v837 = vpack.c.b16 %v684, %v681
    %v838 = vpack.c.b16 %v685, %v682
    %v839 = vpack.c.b16 %v686, %v683
    %v840 = vpack.c.b16 %v690, %v687
    %v841 = vpack.c.b16 %v691, %v688
    %v842 = vpack.c.b16 %v692, %v689
    %v843 = vpack.c.b16 %v696, %v693
    %v844 = vpack.c.b16 %v697, %v694
    %v845 = vpack.c.b16 %v698, %v695
    %v846 = vpack.c.b16 %v702, %v699
    %v847 = vpack.c.b16 %v703, %v700
    %v848 = vpack.c.b16 %v704, %v701
    %v849 = vpack.c.b16 %v708, %v705
    %v850 = vpack.c.b16 %v709, %v706
    %v851 = vpack.c.b16 %v710, %v707
    %v852 = vpack.c.b16 %v714, %v711
    %v853 = vpack.c.b16 %v715, %v712
    %v854 = vpack.c.b16 %v716, %v713
    %v855 = vpack.c.b16 %v720, %v717
    %v856 = vpack.c.b16 %v721, %v718
    %v857 = vpack.c.b16 %v722, %v719
    %v858 = vpack.c.b16 %v726, %v723
    %v859 = vpack.c.b16 %v727, %v724
    %v860 = vpack.c.b16 %v728, %v725
    %v861 = vpack.c.b16 %v732, %v729
    %v862 = vpack.c.b16 %v733, %v730
    %v863 = vpack.c.b16 %v734, %v731
    %v864 = vpack.c.b16 %v738, %v735
    %v865 = vpack.c.b16 %v739, %v736
    %v866 = vpack.c.b16 %v740, %v737
    %v867 = vpack.c.b16 %v744, %v741
    %v868 = vpack.c.b16 %v745, %v742
    %v869 = vpack.c.b16 %v746, %v743
    %v870 = vpack.c.b16 %v750, %v747
    %v871 = vpack.c.b16 %v751, %v748
    %v872 = vpack.c.b16 %v752, %v749
    %v873 = vpack.c.b16 %v756, %v753
    %v874 = vpack.c.b16 %v757, %v754
    %v875 = vpack.c.b16 %v758, %v755
    %v876 = vpack.c.b16 %v762, %v759
    %v877 = vpack.c.b16 %v763, %v760
    %v878 = vpack.c.b16 %v764, %v761
    %v879 = vpack.c.b16 %v768, %v765
    %v880 = vpack.c.b16 %v769, %v766
    %v881 = vpack.c.b16 %v770, %v767
    %v882 = vpack.c.b16 %v774, %v771
    %v883 = vpack.c.b16 %v775, %v772
    %v884 = vpack.c.b16 %v776, %v773
    %v885 = vpack.c.b16 %v780, %v777
    %v886 = vpack.c.b16 %v781, %v778
    %v887 = vpack.c.b16 %v782, %v779
    %v888 = vpack.c.b16 %v786, %v783
    %v889 = vpack.c.b16 %v787, %v784
    %v890 = vpack.c.b16 %v788, %v785
    %v891 = vpack.c.b16 %v792, %v789
    %v892 = vpack.c.b16 %v793, %v790
    %v893 = vpack.c.b16 %v794, %v791
    %v894 = vpack.c.b16 %v798, %v795
    %v895 = vpack.c.b16 %v799, %v796
    %v896 = vpack.c.b16 %v800, %v797
    %993 = vmatprep.subr.bf16.mxu0 %v802
    %994 = vmatpush1.bf16.msra.mxu0 %v801
    %995 = vmatprep.subr.bf16.mxu0 %v805
    %996 = vmatpush1.bf16.msra.mxu0 %v804
    %997 = vmatprep.subr.bf16.mxu0 %v808
    %998 = vmatpush1.bf16.msra.mxu0 %v807
    %999 = vmatprep.subr.bf16.mxu0 %v811
    %1000 = vmatpush1.bf16.msra.mxu0 %v810
    %1001 = vmatprep.subr.bf16.mxu0 %v814
    %1002 = vmatpush1.bf16.msra.mxu0 %v813
    %1003 = vmatprep.subr.bf16.mxu0 %v817
    %1004 = vmatpush1.bf16.msra.mxu0 %v816
    %1005 = vmatprep.subr.bf16.mxu0 %v820
    %1006 = vmatpush1.bf16.msra.mxu0 %v819
    %1007 = vmatprep.subr.bf16.mxu0 %v823
    %1008 = vmatpush1.bf16.msra.mxu0 %v822
    %1009 = vmatprep.subr.bf16.mxu0 %v826
    %1010 = vmatpush1.bf16.msra.mxu0 %v825
    %1011 = vmatprep.subr.bf16.mxu0 %v829
    %1012 = vmatpush1.bf16.msra.mxu0 %v828
    %1013 = vmatprep.subr.bf16.mxu0 %v832
    %1014 = vmatpush1.bf16.msra.mxu0 %v831
    %1015 = vmatprep.subr.bf16.mxu0 %v835
    %1016 = vmatpush1.bf16.msra.mxu0 %v834
    %1017 = vmatprep.subr.bf16.mxu0 %v838
    %1018 = vmatpush1.bf16.msra.mxu0 %v837
    %1019 = vmatprep.subr.bf16.mxu0 %v841
    %1020 = vmatpush1.bf16.msra.mxu0 %v840
    %1021 = vmatprep.subr.bf16.mxu0 %v844
    %1022 = vmatpush1.bf16.msra.mxu0 %v843
    %1023 = vmatprep.subr.bf16.mxu0 %v847
    %1024 = vmatpush1.bf16.msra.mxu0 %v846
    %1025 = vmatprep.mubr.bf16.mxu0 %v333
    %1026 = vmatmul.mubr.bf16.gmra.mrb[0].mxu0 %v332
    %v1027 = vpop.f32.mrb[0].mxu0
    %v1028 = vadd.f32 %v469, %v1027
    %v1029 = vpop.f32.mrb[0].mxu0
    %v1030 = vadd.f32 %v473, %v1029
    %v1031 = vpop.f32.mrb[0].mxu0
    %v1032 = vpop.f32.mrb[0].mxu0
    %1033 = vdwg.mxu0
    %1034 = vmatprep.subr.bf16.mxu0 %v850
    %1035 = vmatpush1.bf16.msra.mxu0 %v849
    %1036 = vmatprep.subr.bf16.mxu0 %v853
    %1037 = vmatpush1.bf16.msra.mxu0 %v852
    %1038 = vmatprep.subr.bf16.mxu0 %v856
    %1039 = vmatpush1.bf16.msra.mxu0 %v855
    %1040 = vmatprep.subr.bf16.mxu0 %v859
    %1041 = vmatpush1.bf16.msra.mxu0 %v858
    %1042 = vmatprep.subr.bf16.mxu0 %v862
    %1043 = vmatpush1.bf16.msra.mxu0 %v861
    %1044 = vmatprep.subr.bf16.mxu0 %v865
    %1045 = vmatpush1.bf16.msra.mxu0 %v864
    %1046 = vmatprep.subr.bf16.mxu0 %v868
    %1047 = vmatpush1.bf16.msra.mxu0 %v867
    %1048 = vmatprep.subr.bf16.mxu0 %v871
    %1049 = vmatpush1.bf16.msra.mxu0 %v870
    %1050 = vmatprep.subr.bf16.mxu0 %v874
    %1051 = vmatpush1.bf16.msra.mxu0 %v873
    %1052 = vmatprep.subr.bf16.mxu0 %v877
    %1053 = vmatpush1.bf16.msra.mxu0 %v876
    %1054 = vmatprep.subr.bf16.mxu0 %v880
    %1055 = vmatpush1.bf16.msra.mxu0 %v879
    %1056 = vmatprep.subr.bf16.mxu0 %v883
    %1057 = vmatpush1.bf16.msra.mxu0 %v882
    %1058 = vmatprep.subr.bf16.mxu0 %v886
    %1059 = vmatpush1.bf16.msra.mxu0 %v885
    %1060 = vmatprep.subr.bf16.mxu0 %v889
    %1061 = vmatpush1.bf16.msra.mxu0 %v888
    %1062 = vmatprep.subr.bf16.mxu0 %v892
    %1063 = vmatpush1.bf16.msra.mxu0 %v891
    %1064 = vmatprep.subr.bf16.mxu0 %v895
    %1065 = vmatpush1.bf16.msra.mxu0 %v894
    %1066 = vmatprep.mubr.bf16.mxu0 %v335
    %1067 = vmatmul.mubr.bf16.gmra.mrb[0].mxu0 %v334
    %v1068 = vpop.f32.mrb[0].mxu0
    %v1069 = vadd.f32 %v1028, %v1068
    %v1070 = vpop.f32.mrb[0].mxu0
    %v1071 = vadd.f32 %v1030, %v1070
    %v1072 = vpop.f32.mrb[0].mxu0
    %v1073 = vpop.f32.mrb[0].mxu0
    %1074 = vdwg.mxu0
    %1075 = vmatprep.subr.bf16.mxu0 0
    %1076 = vmatpush1.bf16.msra.mxu0 %v803
    %1077 = vmatprep.subr.bf16.mxu0 0
    %1078 = vmatpush1.bf16.msra.mxu0 %v806
    %1079 = vmatprep.subr.bf16.mxu0 0
    %1080 = vmatpush1.bf16.msra.mxu0 %v809
    %1081 = vmatprep.subr.bf16.mxu0 0
    %1082 = vmatpush1.bf16.msra.mxu0 %v812
    %1083 = vmatprep.subr.bf16.mxu0 0
    %1084 = vmatpush1.bf16.msra.mxu0 %v815
    %1085 = vmatprep.subr.bf16.mxu0 0
    %1086 = vmatpush1.bf16.msra.mxu0 %v818
    %1087 = vmatprep.subr.bf16.mxu0 0
    %1088 = vmatpush1.bf16.msra.mxu0 %v821
    %1089 = vmatprep.subr.bf16.mxu0 0
    %1090 = vmatpush1.bf16.msra.mxu0 %v824
    %1091 = vmatprep.subr.bf16.mxu0 0
    %1092 = vmatpush1.bf16.msra.mxu0 %v827
    %1093 = vmatprep.subr.bf16.mxu0 0
    %1094 = vmatpush1.bf16.msra.mxu0 %v830
    %1095 = vmatprep.subr.bf16.mxu0 0
    %1096 = vmatpush1.bf16.msra.mxu0 %v833
    %1097 = vmatprep.subr.bf16.mxu0 0
    %1098 = vmatpush1.bf16.msra.mxu0 %v836
    %1099 = vmatprep.subr.bf16.mxu0 0
    %1100 = vmatpush1.bf16.msra.mxu0 %v839
    %1101 = vmatprep.subr.bf16.mxu0 0
    %1102 = vmatpush1.bf16.msra.mxu0 %v842
    %1103 = vmatprep.subr.bf16.mxu0 0
    %1104 = vmatpush1.bf16.msra.mxu0 %v845
    %1105 = vmatprep.subr.bf16.mxu0 0
    %1106 = vmatpush1.bf16.msra.mxu0 %v848
    %1107 = vmatprep.mubr.bf16.mxu0 %v333
    %1108 = vmatmul.mubr.bf16.gmra.mrb[0].mxu0 %v332
    %v1109 = vpop.f32.mrb[0].mxu0
    %v1110 = vadd.f32 %v477, %v1109
    %v1111 = vpop.f32.mrb[0].mxu0
    %v1112 = vpop.f32.mrb[0].mxu0
    %v1113 = vpop.f32.mrb[0].mxu0
    %1114 = vdwg.mxu0
    %1115 = vmatprep.subr.bf16.mxu0 0
    %1116 = vmatpush1.bf16.msra.mxu0 %v851
    %1117 = vmatprep.subr.bf16.mxu0 0
    %1118 = vmatpush1.bf16.msra.mxu0 %v854
    %1119 = vmatprep.subr.bf16.mxu0 0
    %1120 = vmatpush1.bf16.msra.mxu0 %v857
    %1121 = vmatprep.subr.bf16.mxu0 0
    %1122 = vmatpush1.bf16.msra.mxu0 %v860
    %1123 = vmatprep.subr.bf16.mxu0 0
    %1124 = vmatpush1.bf16.msra.mxu0 %v863
    %1125 = vmatprep.subr.bf16.mxu0 0
    %1126 = vmatpush1.bf16.msra.mxu0 %v866
    %1127 = vmatprep.subr.bf16.mxu0 0
    %1128 = vmatpush1.bf16.msra.mxu0 %v869
    %1129 = vmatprep.subr.bf16.mxu0 0
    %1130 = vmatpush1.bf16.msra.mxu0 %v872
    %1131 = vmatprep.subr.bf16.mxu0 0
    %1132 = vmatpush1.bf16.msra.mxu0 %v875
    %1133 = vmatprep.subr.bf16.mxu0 0
    %1134 = vmatpush1.bf16.msra.mxu0 %v878
    %1135 = vmatprep.subr.bf16.mxu0 0
    %1136 = vmatpush1.bf16.msra.mxu0 %v881
    %1137 = vmatprep.subr.bf16.mxu0 0
    %1138 = vmatpush1.bf16.msra.mxu0 %v884
    %1139 = vmatprep.subr.bf16.mxu0 0
    %1140 = vmatpush1.bf16.msra.mxu0 %v887
    %1141 = vmatprep.subr.bf16.mxu0 0
    %1142 = vmatpush1.bf16.msra.mxu0 %v890
    %1143 = vmatprep.subr.bf16.mxu0 0
    %1144 = vmatpush1.bf16.msra.mxu0 %v893
    %1145 = vmatprep.subr.bf16.mxu0 0
    %1146 = vmatpush1.bf16.msra.mxu0 %v896
    %1147 = vmatprep.mubr.bf16.mxu0 %v335
    %1148 = vmatmul.mubr.bf16.gmra.mrb[0].mxu0 %v334
    %v1149 = vpop.f32.mrb[0].mxu0
    %v1150 = vadd.f32 %v1110, %v1149
    %v1151 = vpop.f32.mrb[0].mxu0
    %v1152 = vpop.f32.mrb[0].mxu0
    %v1153 = vpop.f32.mrb[0].mxu0
    %1154 = vdwg.mxu0
    %v1155 = vmax.f32 %v1069, 0.0
    %v1156 = vmax.f32 %v1071, 0.0
    %v1157 = vmax.f32 %v1150, 0.0
    %v1158 = vld [vmem:[%s7] sm:$0x7]
    %v1159 = vunpack.c.l.bf16 %v1158
    %v1161 = vlaneseq
    %v1162 = vshrl.u32 %v1161, 7
    %v1163 = vsub.s32 0, %v1162
    %v1164 = vrot.slane %v1159, %v1163
    %v1165 = vlaneseq
    %v1166 = vshrl.u32 %v1165, 7
    %v1167 = vsub.s32 2, %v1166
    %v1168 = vrot.slane %v1159, %v1167
    %v1169 = vlaneseq
    %v1170 = vshrl.u32 %v1169, 7
    %v1171 = vsub.s32 4, %v1170
    %v1172 = vrot.slane %v1159, %v1171
    %v1176 = vlaneseq
    %v1177 = vshrl.u32 %v1176, 7
    %v1178 = vsub.s32 0, %v1177
    %v1179 = vrot.slane %v1164, %v1178
    %v1180 = vlaneseq
    %v1181 = vshrl.u32 %v1180, 7
    %v1182 = vsub.s32 0, %v1181
    %v1183 = vrot.slane %v1168, %v1182
    %v1184 = vlaneseq
    %v1185 = vshrl.u32 %v1184, 7
    %v1186 = vsub.s32 0, %v1185
    %v1187 = vrot.slane %v1172, %v1186
    %v1188 = vmul.f32 %v1155, %v1179
    %v1189 = vmul.f32 %v1156, %v1183
    %v1190 = vmul.f32 %v1157, %v1187
    %v1191 = vadd.f32 %v1188, %v1189
    %v1192 = vadd.f32 %v1191, %v1190
    %1193 = vadd.xlane.f32.xlu0 %v1192
    %v1194 = vpop.xlane.xlu0 %1193
    %s1195 = sld [smem:[#allocation2]]
    %v1196 = vstv %s1195
    %v1197 = vadd.f32 %v1194, %v1196
    %v1199 = vlaneseq
    %v1200 = vand.u32 %v1199, 127
    %v1201 = vlaneseq
    %v1202 = vshrl.u32 %v1201, 7
    %v1203 = vsub.s32 %v1200, %v1202
    %v1204 = vrot.slane %v1197, %v1203
    %vm1206 = vcmask 57344
    %1207 = vst.msk [vmem:[#allocation8] sm:$0x1] %vm1206, %v1204
    // Predicated region
    $region46: #{tpu_custom_call.1} parent=1 // pred_check
      _
    $region47: #{tpu_custom_call.1} parent=1 // pred_check_branch
      %1209 = sbr.rel (0) target = $region49
    $region48: #{tpu_custom_call.1} parent=1 // pred_region
      %s1211 = ssub.s32 16, 16
      %1212 = vsyncadd [#allocation5], %s1211
      %s1214 = sshll.u32 [#allocation8], 4
      %s1215 = int_to_ptr.vmem [resolvable:$true] %s1214
      %1217 = dma.vmem_to_hbm [thread:$0]  %s1215, 16, %s9, [#allocation5]
    $region49: #{tpu_custom_call.1} parent=1 // pred_fallthru
      _
    // Predicated region
    $region50: #{tpu_custom_call.1} parent=1 // pred_check
      _
    $region51: #{tpu_custom_call.1} parent=1 // pred_check_branch
      %1219 = sbr.rel (0) target = $region53
    $region52: #{tpu_custom_call.1} parent=1 // pred_region
      %1220 = dma.done [#allocation5], 16
    $region53: #{tpu_custom_call.1} parent=1 // pred_fallthru
      _
    %1221 = vsyncpa [#allocation4], 1
    %1222 = vsyncpa [#allocation7], 1
    %1223 = vsyncpa [#allocation5], 1

</llo_original>
